<compile_context>
chip_gen: v5e
topology: v5e:2x2
jax: 0.10.0
libtpu: 0.0.40
codegen_flags: <defaults>
</compile_context>

<pallas_src>
import functools

import jax
import jax.numpy as jnp
from jax.experimental import pallas as pl
from jax.experimental.pallas import tpu as pltpu

_LANE = 128


def _round_up(x, m):
    return ((x + m - 1) // m) * m


def _actor_critic_kernel(x_ref, mask_ref, w1_ref, b12_ref, w2_ref,
                         wh_ref, bh_ref, logp_ref, aux_ref, *, act_dim):
    x = x_ref[...]
    b12 = b12_ref[...]
    b1 = b12[0:1, :]
    b2 = b12[1:2, :]

    # hidden layer 1 / 2: Linear + ReLU (MXU matmul, f32 accumulation)
    h1 = jnp.dot(x, w1_ref[...], preferred_element_type=jnp.float32) + b1
    h1 = jnp.maximum(h1, 0.0)
    h2 = jnp.dot(h1, w2_ref[...], preferred_element_type=jnp.float32) + b2
    h2 = jnp.maximum(h2, 0.0)

    # fused actor+critic head: lanes [0, act_dim) = actor logits,
    # lane act_dim = critic value, remaining lanes zero-padded.
    head = jnp.dot(h2, wh_ref[...], preferred_element_type=jnp.float32) + bh_ref[...]

    col = jax.lax.broadcasted_iota(jnp.int32, head.shape, 1)
    # critic value: VPU select + XLU row-reduce (no degenerate N=1 matmul)
    value = jnp.sum(jnp.where(col == act_dim, head, 0.0), axis=-1, keepdims=True)

    # masked log-softmax over the (padded) action axis; padded lanes and the
    # critic lane are masked out on the host (mask_p == 0 there).
    mask = mask_ref[...]
    masked = jnp.where(mask > 0, head, jnp.float32(-1e9))
    m = jnp.max(masked, axis=-1, keepdims=True)
    e = jnp.exp(masked - m)
    s = jnp.sum(e, axis=-1, keepdims=True)
    log_s = jnp.log(s)
    inv_s = pl.reciprocal(s, approx=True)     # EUP slot — effectively free

    logp_ref[...] = masked - m - log_s        # lane-dense (tb, 128) store

    # greedy action = first lane achieving the row max
    big = jnp.int32(2 ** 30)
    action = jnp.min(jnp.where(masked >= m, col, big), axis=-1, keepdims=True)
    # log-prob of the greedy action: logp at the argmax lane == -log(s)
    log_prob = -log_s
    # entropy = -sum(p * logp) = log(s) - sum(e * (masked - m)) / s
    entropy = log_s - jnp.sum(e * (masked - m), axis=-1, keepdims=True) * inv_s

    # pack scalars into one lane-dense (tb, 128) auxiliary slab:
    # lane 0 = value, lane 1 = log_prob(argmax), lane 2 = action, lane 3 = entropy
    aux = jnp.where(col == 0, value, 0.0)
    aux = jnp.where(col == 1, log_prob, aux)
    aux = jnp.where(col == 2, action.astype(jnp.float32), aux)
    aux = jnp.where(col == 3, entropy, aux)
    aux_ref[...] = aux


def actor_critic_forward(state, mask, fused):
    """Fused ActorCritic MLP forward.

    state: (B, OBS) f32, mask: (B, A) f32 (1 = legal action, 0 = illegal;
    every row must contain at least one legal action).
    Returns (logp (B, A), value (B,), action (B,) int32, log_prob (B,), entropy (B,)).
    """
    state = state.astype(jnp.float32)
    mask = mask.astype(jnp.float32)
    B, OBS = state.shape
    A = fused["act_dim"]
    H = fused["w1"].shape[1]
    LP = fused["wh"].shape[1]

    # pad mask to the lane-dense head width; padded lanes (incl. critic lane)
    # are illegal so the softmax ignores them.
    mask_p = jnp.zeros((B, LP), jnp.float32).at[:, :A].set(mask)

    # batch tiling: single block at toy sizes, MXU-aligned tiles at real batch.
    if B > 256 and B % 256 == 0:
        tb = 256
    elif B > 128 and B % 128 == 0:
        tb = 128
    else:
        tb = B
    grid = (B // tb,)

    def batched(shape):
        return pl.BlockSpec(shape, lambda i: (i, 0))

    def const(shape):
        return pl.BlockSpec(shape, lambda i: (0, 0))   # VMEM-resident weights

    kernel = functools.partial(_actor_critic_kernel, act_dim=A)
    logp_p, aux = pl.pallas_call(
        kernel,
        out_shape=(
            jax.ShapeDtypeStruct((B, LP), jnp.float32),
            jax.ShapeDtypeStruct((B, LP), jnp.float32),
        ),
        grid=grid,
        in_specs=[
            batched((tb, OBS)),     # state
            batched((tb, LP)),      # padded mask
            const((OBS, H)),        # w1
            const((2, H)),          # [b1; b2]
            const((H, H)),          # w2
            const((H, LP)),         # fused head weight [wa | wc | 0-pad]
            const((1, LP)),         # fused head bias
        ],
        out_specs=(batched((tb, LP)), batched((tb, LP))),
        compiler_params=pltpu.CompilerParams(
            dimension_semantics=("parallel",)),
    )(state, mask_p, fused["w1"], fused["b12"], fused["w2"],
      fused["wh"], fused["bh"])

    logp = logp_p[:, :A]
    value = aux[:, 0]
    log_prob = aux[:, 1]
    action = aux[:, 2].astype(jnp.int32)
    entropy = aux[:, 3]
    return logp, value, action, log_prob, entropy


class NNWrapperPallas:
    """JAX/Pallas port of NNWrapper with policy_name='actor_critic' (MLP)."""

    def __init__(self, obs_shape, action_shape, hidden=64,
                 train_on_fixed=False, seed=0):
        self.policy_name = "actor_critic"
        self.train_on_fixed = train_on_fixed
        obs_dim = obs_shape if isinstance(obs_shape, int) else int(obs_shape[0])
        act_dim = action_shape if isinstance(action_shape, int) else int(action_shape[0])
        self.obs_dim, self.act_dim, self.hidden = obs_dim, act_dim, hidden

        # Deterministic parameter init (synthetic weights, no checkpoint).
        key = jax.random.PRNGKey(seed)
        k1, k2, k3, k4 = jax.random.split(key, 4)
        s = 0.1
        self.params = {
            "w1": s * jax.random.normal(k1, (obs_dim, hidden), jnp.float32),
            "b1": jnp.zeros((1, hidden), jnp.float32),
            "w2": s * jax.random.normal(k2, (hidden, hidden), jnp.float32),
            "b2": jnp.zeros((1, hidden), jnp.float32),
            "wa": s * jax.random.normal(k3, (hidden, act_dim), jnp.float32),
            "ba": jnp.zeros((1, act_dim), jnp.float32),
            "wc": s * jax.random.normal(k4, (hidden, 1), jnp.float32),
            "bc": jnp.zeros((1, 1), jnp.float32),
        }
        self.fused = self._fuse_params(self.params)

    def _fuse_params(self, p):
        """Concatenate actor/critic head weights and pad to a lane-dense slab."""
        H, A = self.hidden, self.act_dim
        LP = max(_LANE, _round_up(A + 1, _LANE))
        wh = jnp.zeros((H, LP), jnp.float32)
        wh = wh.at[:, :A].set(p["wa"]).at[:, A:A + 1].set(p["wc"])
        bh = jnp.zeros((1, LP), jnp.float32)
        bh = bh.at[:, :A].set(p["ba"]).at[:, A:A + 1].set(p["bc"])
        return {
            "act_dim": A,
            "w1": p["w1"],
            "b12": jnp.concatenate([p["b1"], p["b2"]], axis=0),  # (2, H)
            "w2": p["w2"],
            "wh": wh,
            "bh": bh,
        }

    # policy.act: value, greedy action, log_prob of that action
    def act(self, state, mask):
        _, value, action, log_prob, _ = actor_critic_forward(state, mask, self.fused)
        # TODO(synk): train_on_fixed / FixedAgent heuristic branch (pure Python
        # table lookups, no tensor compute) is not reproduced here.
        return value, action, log_prob

    # policy.eval_action: value, log_prob(given action), entropy
    def eval_action(self, state, action, mask=None):
        if mask is None:
            mask = jnp.ones((state.shape[0], self.act_dim), jnp.float32)
        logp, value, _, _, entropy = actor_critic_forward(state, mask, self.fused)
        log_prob = jnp.take_along_axis(logp, action[:, None], axis=-1)[:, 0]
        return value, log_prob, entropy

    def get_value(self, state, mask=None):
        if mask is None:
            mask = jnp.ones((state.shape[0], self.act_dim), jnp.float32)
        _, value, _, _, _ = actor_critic_forward(state, mask, self.fused)
        return value

    # Pure-scalar auction heuristic (no tensor compute) — kept in Python.
    def auction_policy(self, max_bid, org_price, state, cash):
        if max_bid >= org_price * 2:
            return (True, 0)
        if cash >= max_bid * 3:
            bid = max_bid + int(0.1 * org_price)
            return (False, bid)
        return (True, 0)


if __name__ == "__main__":
    B, OBS, ACT = 8, 32, 16
    key = jax.random.PRNGKey(0)
    ks, km = jax.random.split(key)
    state = jax.random.normal(ks, (B, OBS), jnp.float32)
    # binary action mask with at least one legal action per row
    mask = (jax.random.uniform(km, (B, ACT)) > 0.3).astype(jnp.float32)
    mask = mask.at[:, 0].set(1.0)

    wrapper = NNWrapperPallas(OBS, ACT, hidden=64, seed=0)
    value, action, log_prob = wrapper.act(state, mask)
    v2, lp2, entropy = wrapper.eval_action(state, action, mask)
    jax.block_until_ready((value, action, log_prob, v2, lp2, entropy))

    # lightweight sanity check vs. plain-JAX reference
    p = wrapper.params
    h1 = jax.nn.relu(state @ p["w1"] + p["b1"])
    h2 = jax.nn.relu(h1 @ p["w2"] + p["b2"])
    logits = h2 @ p["wa"] + p["ba"]
    v_ref = (h2 @ p["wc"] + p["bc"])[:, 0]
    masked = jnp.where(mask > 0, logits, -1e9)
    logp_ref = jax.nn.log_softmax(masked, axis=-1)
    a_ref = jnp.argmax(logp_ref, axis=-1)
    lp_ref = jnp.take_along_axis(logp_ref, a_ref[:, None], -1)[:, 0]
    ent_ref = -jnp.sum(jnp.exp(logp_ref) * logp_ref, axis=-1)

    assert jnp.allclose(value, v_ref, atol=1e-4)
    assert jnp.all(action == a_ref)
    assert jnp.allclose(log_prob, lp_ref, atol=1e-4)
    assert jnp.allclose(v2, v_ref, atol=1e-4)
    assert jnp.allclose(lp2, lp_ref, atol=1e-4)
    assert jnp.allclose(entropy, ent_ref, atol=5e-3)  # approx EUP reciprocal
    print("KERNEL_OK")
</pallas_src>

<mosaic_0001>
module attributes {stable_mosaic.version = 11 : i64} {
  func.func @_actor_critic_kernel(%arg0: i32, %arg1: memref<8x32xf32, #tpu.memory_space<vmem>>, %arg2: memref<8x128xf32, #tpu.memory_space<vmem>>, %arg3: memref<32x64xf32, #tpu.memory_space<vmem>>, %arg4: memref<2x64xf32, #tpu.memory_space<vmem>>, %arg5: memref<64x64xf32, #tpu.memory_space<vmem>>, %arg6: memref<64x128xf32, #tpu.memory_space<vmem>>, %arg7: memref<1x128xf32, #tpu.memory_space<vmem>>, %arg8: memref<8x128xf32, #tpu.memory_space<vmem>>, %arg9: memref<8x128xf32, #tpu.memory_space<vmem>>) attributes {dimension_semantics = [#tpu.dimension_semantics<parallel>], iteration_bounds = array<i64: 1>, scalar_prefetch = 0 : i64, scratch_operands = 0 : i64, tpu.core_type = #tpu.core_type<tc>, window_params = [{transform_indices = @transform_0, window_bounds = array<i64: 8, 32>}, {transform_indices = @transform_1, window_bounds = array<i64: 8, 128>}, {pipeline_mode = #tpu.pipeline_mode<synchronous>, transform_indices = @transform_2, window_bounds = array<i64: 32, 64>}, {pipeline_mode = #tpu.pipeline_mode<synchronous>, transform_indices = @transform_3, window_bounds = array<i64: 2, 64>}, {pipeline_mode = #tpu.pipeline_mode<synchronous>, transform_indices = @transform_4, window_bounds = array<i64: 64, 64>}, {pipeline_mode = #tpu.pipeline_mode<synchronous>, transform_indices = @transform_5, window_bounds = array<i64: 64, 128>}, {pipeline_mode = #tpu.pipeline_mode<synchronous>, transform_indices = @transform_6, window_bounds = array<i64: 1, 128>}, {transform_indices = @transform_7, window_bounds = array<i64: 8, 128>}, {transform_indices = @transform_8, window_bounds = array<i64: 8, 128>}]} {
    %c0 = arith.constant 0 : index
    %c0_0 = arith.constant 0 : index
    %0 = vector.load %arg1[%c0, %c0_0] : memref<8x32xf32, #tpu.memory_space<vmem>>, vector<8x32xf32>
    %c0_1 = arith.constant 0 : index
    %c0_2 = arith.constant 0 : index
    %1 = vector.load %arg4[%c0_1, %c0_2] : memref<2x64xf32, #tpu.memory_space<vmem>>, vector<2x64xf32>
    %2 = vector.extract_strided_slice %1 {offsets = [0, 0], sizes = [1, 64], strides = [1, 1]} : vector<2x64xf32> to vector<1x64xf32>
    %3 = vector.extract_strided_slice %1 {offsets = [1, 0], sizes = [1, 64], strides = [1, 1]} : vector<2x64xf32> to vector<1x64xf32>
    %c0_3 = arith.constant 0 : index
    %c0_4 = arith.constant 0 : index
    %4 = vector.load %arg3[%c0_3, %c0_4] : memref<32x64xf32, #tpu.memory_space<vmem>>, vector<32x64xf32>
    %cst = arith.constant dense<0.000000e+00> : vector<8x64xf32>
    %5 = tpu.matmul %0, %4, %cst {dimension_numbers = #tpu.dot_dimension_numbers<[1], [0], [0], [1], [0, 0, 1, 1], [], []>} : vector<8x32xf32>, vector<32x64xf32>, vector<8x64xf32> -> vector<8x64xf32>
    %6 = vector.broadcast %2 : vector<1x64xf32> to vector<8x64xf32>
    %7 = arith.addf %5, %6 : vector<8x64xf32>
    %cst_5 = arith.constant 0.000000e+00 : f32
    %8 = vector.broadcast %cst_5 : f32 to vector<8x64xf32>
    %9 = arith.maximumf %7, %8 : vector<8x64xf32>
    %c0_6 = arith.constant 0 : index
    %c0_7 = arith.constant 0 : index
    %10 = vector.load %arg5[%c0_6, %c0_7] : memref<64x64xf32, #tpu.memory_space<vmem>>, vector<64x64xf32>
    %cst_8 = arith.constant dense<0.000000e+00> : vector<8x64xf32>
    %11 = tpu.matmul %9, %10, %cst_8 {dimension_numbers = #tpu.dot_dimension_numbers<[1], [0], [0], [1], [0, 0, 1, 1], [], []>} : vector<8x64xf32>, vector<64x64xf32>, vector<8x64xf32> -> vector<8x64xf32>
    %12 = vector.broadcast %3 : vector<1x64xf32> to vector<8x64xf32>
    %13 = arith.addf %11, %12 : vector<8x64xf32>
    %cst_9 = arith.constant 0.000000e+00 : f32
    %14 = vector.broadcast %cst_9 : f32 to vector<8x64xf32>
    %15 = arith.maximumf %13, %14 : vector<8x64xf32>
    %c0_10 = arith.constant 0 : index
    %c0_11 = arith.constant 0 : index
    %16 = vector.load %arg6[%c0_10, %c0_11] : memref<64x128xf32, #tpu.memory_space<vmem>>, vector<64x128xf32>
    %cst_12 = arith.constant dense<0.000000e+00> : vector<8x128xf32>
    %17 = tpu.matmul %15, %16, %cst_12 {dimension_numbers = #tpu.dot_dimension_numbers<[1], [0], [0], [1], [0, 0, 1, 1], [], []>} : vector<8x64xf32>, vector<64x128xf32>, vector<8x128xf32> -> vector<8x128xf32>
    %c0_13 = arith.constant 0 : index
    %c0_14 = arith.constant 0 : index
    %18 = vector.load %arg7[%c0_13, %c0_14] : memref<1x128xf32, #tpu.memory_space<vmem>>, vector<1x128xf32>
    %19 = vector.broadcast %18 : vector<1x128xf32> to vector<8x128xf32>
    %20 = arith.addf %17, %19 : vector<8x128xf32>
    %21 = tpu.iota {dimensions = array<i32: 1>} : vector<8x128xi32>
    %c16_i32 = arith.constant 16 : i32
    %22 = vector.broadcast %c16_i32 : i32 to vector<8x128xi32>
    %23 = arith.cmpi eq, %21, %22 : vector<8x128xi32>
    %cst_15 = arith.constant 0.000000e+00 : f32
    %24 = vector.broadcast %cst_15 : f32 to vector<8x128xf32>
    %25 = arith.select %23, %20, %24 : vector<8x128xi1>, vector<8x128xf32>
    %cst_16 = arith.constant dense<0.000000e+00> : vector<8xf32>
    %26 = vector.multi_reduction <add>, %25, %cst_16 [1] : vector<8x128xf32> to vector<8xf32>
    %27 = vector.shape_cast %26 : vector<8xf32> to vector<8x1xf32>
    %c0_17 = arith.constant 0 : index
    %c0_18 = arith.constant 0 : index
    %28 = vector.load %arg2[%c0_17, %c0_18] : memref<8x128xf32, #tpu.memory_space<vmem>>, vector<8x128xf32>
    %cst_19 = arith.constant 0.000000e+00 : f32
    %29 = vector.broadcast %cst_19 : f32 to vector<8x128xf32>
    %30 = arith.cmpf ogt, %28, %29 : vector<8x128xf32>
    %cst_20 = arith.constant -1.000000e+09 : f32
    %31 = vector.broadcast %cst_20 : f32 to vector<8x128xf32>
    %32 = arith.select %30, %20, %31 : vector<8x128xi1>, vector<8x128xf32>
    %cst_21 = arith.constant dense<0xFF800000> : vector<8xf32>
    %33 = vector.multi_reduction <maximumf>, %32, %cst_21 [1] : vector<8x128xf32> to vector<8xf32>
    %34 = vector.shape_cast %33 : vector<8xf32> to vector<8x1xf32>
    %35 = vector.broadcast %34 : vector<8x1xf32> to vector<8x128xf32>
    %36 = arith.subf %32, %35 : vector<8x128xf32>
    %37 = math.exp %36 : vector<8x128xf32>
    %cst_22 = arith.constant dense<0.000000e+00> : vector<8xf32>
    %38 = vector.multi_reduction <add>, %37, %cst_22 [1] : vector<8x128xf32> to vector<8xf32>
    %39 = vector.shape_cast %38 : vector<8xf32> to vector<8x1xf32>
    %40 = math.log %39 : vector<8x1xf32>
    %41 = tpu.reciprocal %39 {approx = true} : vector<8x1xf32> -> vector<8x1xf32>
    %42 = vector.broadcast %34 : vector<8x1xf32> to vector<8x128xf32>
    %43 = arith.subf %32, %42 : vector<8x128xf32>
    %44 = vector.broadcast %40 : vector<8x1xf32> to vector<8x128xf32>
    %45 = arith.subf %43, %44 : vector<8x128xf32>
    %c0_23 = arith.constant 0 : index
    %c0_24 = arith.constant 0 : index
    %46 = vector.load %arg8[%c0_23, %c0_24] : memref<8x128xf32, #tpu.memory_space<vmem>>, vector<8x128xf32>
    tpu.vector_store %arg8[%c0_23, %c0_24], %45 {strides = array<i32>} : memref<8x128xf32, #tpu.memory_space<vmem>>, vector<8x128xf32>,
    %47 = vector.broadcast %34 : vector<8x1xf32> to vector<8x128xf32>
    %48 = arith.cmpf oge, %32, %47 : vector<8x128xf32>
    %c1073741824_i32 = arith.constant 1073741824 : i32
    %49 = vector.broadcast %c1073741824_i32 : i32 to vector<8x128xi32>
    %50 = arith.select %48, %21, %49 : vector<8x128xi1>, vector<8x128xi32>
    %cst_25 = arith.constant dense<2147483647> : vector<8xi32>
    %51 = vector.multi_reduction <minsi>, %50, %cst_25 [1] : vector<8x128xi32> to vector<8xi32>
    %52 = vector.shape_cast %51 : vector<8xi32> to vector<8x1xi32>
    %cst_26 = arith.constant 0.000000e+00 : f32
    %53 = vector.broadcast %cst_26 : f32 to vector<8x1xf32>
    %54 = arith.subf %53, %40 : vector<8x1xf32>
    %55 = vector.broadcast %34 : vector<8x1xf32> to vector<8x128xf32>
    %56 = arith.subf %32, %55 : vector<8x128xf32>
    %57 = arith.mulf %37, %56 : vector<8x128xf32>
    %cst_27 = arith.constant dense<0.000000e+00> : vector<8xf32>
    %58 = vector.multi_reduction <add>, %57, %cst_27 [1] : vector<8x128xf32> to vector<8xf32>
    %59 = vector.shape_cast %58 : vector<8xf32> to vector<8x1xf32>
    %60 = arith.mulf %59, %41 : vector<8x1xf32>
    %61 = arith.subf %40, %60 : vector<8x1xf32>
    %c0_i32 = arith.constant 0 : i32
    %62 = vector.broadcast %c0_i32 : i32 to vector<8x128xi32>
    %63 = arith.cmpi eq, %21, %62 : vector<8x128xi32>
    %cst_28 = arith.constant 0.000000e+00 : f32
    %64 = vector.shape_cast %27 : vector<8x1xf32> to vector<8x1xf32>
    %65 = vector.broadcast %64 : vector<8x1xf32> to vector<8x128xf32>
    %66 = vector.broadcast %cst_28 : f32 to vector<8x128xf32>
    %67 = arith.select %63, %65, %66 : vector<8x128xi1>, vector<8x128xf32>
    %c1_i32 = arith.constant 1 : i32
    %68 = vector.broadcast %c1_i32 : i32 to vector<8x128xi32>
    %69 = arith.cmpi eq, %21, %68 : vector<8x128xi32>
    %70 = vector.shape_cast %54 : vector<8x1xf32> to vector<8x1xf32>
    %71 = vector.broadcast %70 : vector<8x1xf32> to vector<8x128xf32>
    %72 = arith.select %69, %71, %67 : vector<8x128xi1>, vector<8x128xf32>
    %c2_i32 = arith.constant 2 : i32
    %73 = vector.broadcast %c2_i32 : i32 to vector<8x128xi32>
    %74 = arith.cmpi eq, %21, %73 : vector<8x128xi32>
    %75 = arith.sitofp %52 : vector<8x1xi32> to vector<8x1xf32>
    %76 = vector.shape_cast %75 : vector<8x1xf32> to vector<8x1xf32>
    %77 = vector.broadcast %76 : vector<8x1xf32> to vector<8x128xf32>
    %78 = arith.select %74, %77, %72 : vector<8x128xi1>, vector<8x128xf32>
    %c3_i32 = arith.constant 3 : i32
    %79 = vector.broadcast %c3_i32 : i32 to vector<8x128xi32>
    %80 = arith.cmpi eq, %21, %79 : vector<8x128xi32>
    %81 = vector.shape_cast %61 : vector<8x1xf32> to vector<8x1xf32>
    %82 = vector.broadcast %81 : vector<8x1xf32> to vector<8x128xf32>
    %83 = arith.select %80, %82, %78 : vector<8x128xi1>, vector<8x128xf32>
    %c0_29 = arith.constant 0 : index
    %c0_30 = arith.constant 0 : index
    %84 = vector.load %arg9[%c0_29, %c0_30] : memref<8x128xf32, #tpu.memory_space<vmem>>, vector<8x128xf32>
    tpu.vector_store %arg9[%c0_29, %c0_30], %83 {strides = array<i32>} : memref<8x128xf32, #tpu.memory_space<vmem>>, vector<8x128xf32>,
    return
  }
  func.func @transform_0(%arg0: i32) -> (i32, i32) {
    %c0_i32 = arith.constant 0 : i32
    %c0_i32_0 = arith.constant 0 : i32
    return %arg0, %c0_i32 : i32, i32
  }
  func.func @transform_1(%arg0: i32) -> (i32, i32) {
    %c0_i32 = arith.constant 0 : i32
    %c0_i32_0 = arith.constant 0 : i32
    return %arg0, %c0_i32 : i32, i32
  }
  func.func @transform_2(%arg0: i32) -> (i32, i32) {
    %c0_i32 = arith.constant 0 : i32
    %c0_i32_0 = arith.constant 0 : i32
    %c0_i32_1 = arith.constant 0 : i32
    return %c0_i32, %c0_i32_0 : i32, i32
  }
  func.func @transform_3(%arg0: i32) -> (i32, i32) {
    %c0_i32 = arith.constant 0 : i32
    %c0_i32_0 = arith.constant 0 : i32
    %c0_i32_1 = arith.constant 0 : i32
    return %c0_i32, %c0_i32_0 : i32, i32
  }
  func.func @transform_4(%arg0: i32) -> (i32, i32) {
    %c0_i32 = arith.constant 0 : i32
    %c0_i32_0 = arith.constant 0 : i32
    %c0_i32_1 = arith.constant 0 : i32
    return %c0_i32, %c0_i32_0 : i32, i32
  }
  func.func @transform_5(%arg0: i32) -> (i32, i32) {
    %c0_i32 = arith.constant 0 : i32
    %c0_i32_0 = arith.constant 0 : i32
    %c0_i32_1 = arith.constant 0 : i32
    return %c0_i32, %c0_i32_0 : i32, i32
  }
  func.func @transform_6(%arg0: i32) -> (i32, i32) {
    %c0_i32 = arith.constant 0 : i32
    %c0_i32_0 = arith.constant 0 : i32
    %c0_i32_1 = arith.constant 0 : i32
    return %c0_i32, %c0_i32_0 : i32, i32
  }
  func.func @transform_7(%arg0: i32) -> (i32, i32) {
    %c0_i32 = arith.constant 0 : i32
    %c0_i32_0 = arith.constant 0 : i32
    return %arg0, %c0_i32 : i32, i32
  }
  func.func @transform_8(%arg0: i32) -> (i32, i32) {
    %c0_i32 = arith.constant 0 : i32
    %c0_i32_0 = arith.constant 0 : i32
    return %arg0, %c0_i32 : i32, i32
  }
}

</mosaic_0001>

<llo_original>
// kernel: tpu_custom_call.1
$region0: #{tpu_custom_call.1}
  #allocation0 [shape = 'u32[]', space=smem, size = 0x4, offset = 0x4, fixed_abs, tag = 'smem constant byte address 0x4 - core index']
  #allocation1 [shape = 'u32[72,128]{1,0:T(1,128)}', space=vmem, size = 0x9000, scoped, tag = 'internal scratch']
  %s0 = inlined_call_operand.hbm [shape: f32[8,32], index: 0, kind: input, shape index: {}]
  %s1 = inlined_call_operand.hbm [shape: f32[8,128], index: 1, kind: input, shape index: {}]
  %s2 = inlined_call_operand.hbm [shape: f32[32,64], index: 2, kind: input, shape index: {}]
  %s3 = inlined_call_operand.vmem [shape: f32[2,64], index: 3, kind: input, shape index: {}]
  %s4 = inlined_call_operand.hbm [shape: f32[64,64], index: 4, kind: input, shape index: {}]
  %s5 = inlined_call_operand.hbm [shape: f32[64,128], index: 5, kind: input, shape index: {}]
  %s6 = inlined_call_operand.vmem [shape: f32[1,128], index: 6, kind: input, shape index: {}]
  %s7 = inlined_call_operand.hbm [shape: f32[8,128], index: 7, kind: output, shape index: {0}]
  %s8 = inlined_call_operand.hbm [shape: f32[8,128], index: 8, kind: output, shape index: {1}]
  %9 = xla_tuple %s7, %s8
  %s10 = sld [smem:[#allocation0]]
  $region66: #{tpu_custom_call.1} parent=0
    _
  %s12 = ssub.s32 1, %s10
  %s13 = scalar_select 0, %s12, %s10
  $region1: #{tpu_custom_call.1} parent=0
    #allocation2 [shape = 'u8[4096]{0}', space=vmem, size = 0x1000, scoped, tag = 'input window, operand 0, single buffered']
    #allocation3 [shape = 's32[1]{0}', space=sflag, size = 0x4, scoped, tag = 'scoped memory for tpu_custom_call.1']
    #allocation4 [shape = 's32[1]{0}', space=sflag, size = 0x4, scoped, tag = 'scoped memory for tpu_custom_call.1']
    #allocation5 [shape = 'u8[4096]{0}', space=vmem, size = 0x1000, scoped, tag = 'input window, operand 1, single buffered']
    #allocation6 [shape = 's32[1]{0}', space=sflag, size = 0x4, scoped, tag = 'scoped memory for tpu_custom_call.1']
    #allocation7 [shape = 'u8[16384]{0}', space=vmem, size = 0x4000, scoped, tag = 'input window, operand 2, single buffered']
    #allocation8 [shape = 'u8[32768]{0}', space=vmem, size = 0x8000, scoped, tag = 'input window, operand 4, single buffered']
    #allocation9 [shape = 's32[1]{0}', space=sflag, size = 0x4, scoped, tag = 'scoped memory for tpu_custom_call.1']
    #allocation10 [shape = 'u8[32768]{0}', space=vmem, size = 0x8000, scoped, tag = 'input window, operand 5, single buffered']
    #allocation11 [shape = 'u8[4096]{0}', space=vmem, size = 0x1000, scoped, tag = 'output window, operand 0, single buffered']
    #allocation12 [shape = 'u8[4096]{0}', space=vmem, size = 0x1000, scoped, tag = 'output window, operand 1, single buffered']
    #allocation13 [shape = 's32[1]{0}', space=sflag, size = 0x4, scoped, tag = 'scoped memory for tpu_custom_call.1']
    %14 = vsyncpa [#allocation3], 0
    %15 = vsyncpa [#allocation6], 0
    %16 = vsyncpa [#allocation9], 0
    %17 = vsyncpa [#allocation4], 0
    %18 = vsyncpa [#allocation13], 0
    // Predicated region
    $region2: #{tpu_custom_call.1} parent=1 // pred_check
      _
    $region3: #{tpu_custom_call.1} parent=1 // pred_check_branch
      %20 = sbr.rel (0) target = $region5
    $region4: #{tpu_custom_call.1} parent=1 // pred_region
      %22 = vsyncadd [#allocation3], 0
      %s24 = sshll.u32 %s0, 4
      %s25 = int_to_ptr.hbm [resolvable:$true] %s24
      %s26 = sshll.u32 [#allocation2], 4
      %s27 = int_to_ptr.vmem [resolvable:$true] %s26
      %29 = dma.hbm_to_vmem [thread:$0]  %s25, 128, %s27, [#allocation3]
    $region5: #{tpu_custom_call.1} parent=1 // pred_fallthru
      _
    // Predicated region
    $region6: #{tpu_custom_call.1} parent=1 // pred_check
      _
    $region7: #{tpu_custom_call.1} parent=1 // pred_check_branch
      %31 = sbr.rel (0) target = $region9
    $region8: #{tpu_custom_call.1} parent=1 // pred_region
      %33 = vsyncadd [#allocation6], 0
      %s35 = sshll.u32 %s1, 4
      %s36 = int_to_ptr.hbm [resolvable:$true] %s35
      %s37 = sshll.u32 [#allocation5], 4
      %s38 = int_to_ptr.vmem [resolvable:$true] %s37
      %40 = dma.hbm_to_vmem [thread:$0]  %s36, 128, %s38, [#allocation6]
    $region9: #{tpu_custom_call.1} parent=1 // pred_fallthru
      _
    // Predicated region
    $region10: #{tpu_custom_call.1} parent=1 // pred_check
      _
    $region11: #{tpu_custom_call.1} parent=1 // pred_check_branch
      %42 = sbr.rel (0) target = $region13
    $region12: #{tpu_custom_call.1} parent=1 // pred_region
      %44 = vsyncadd [#allocation6], 0
      %s45 = sshll.u32 %s2, 4
      %s46 = int_to_ptr.hbm [resolvable:$true] %s45
      %s47 = sshll.u32 [#allocation7], 4
      %s48 = int_to_ptr.vmem [resolvable:$true] %s47
      %53 = dma.hbm_to_vmem [thread:$0]  %s46, 512, %s48, [#allocation6], 128, 128, 8
    $region13: #{tpu_custom_call.1} parent=1 // pred_fallthru
      _
    // Predicated region
    $region14: #{tpu_custom_call.1} parent=1 // pred_check
      _
    $region15: #{tpu_custom_call.1} parent=1 // pred_check_branch
      %55 = sbr.rel (0) target = $region17
    $region16: #{tpu_custom_call.1} parent=1 // pred_region
      _
    $region17: #{tpu_custom_call.1} parent=1 // pred_fallthru
      _
    // Predicated region
    $region18: #{tpu_custom_call.1} parent=1 // pred_check
      _
    $region19: #{tpu_custom_call.1} parent=1 // pred_check_branch
      %57 = sbr.rel (0) target = $region21
    $region20: #{tpu_custom_call.1} parent=1 // pred_region
      %59 = vsyncadd [#allocation9], 0
      %s60 = sshll.u32 %s4, 4
      %s61 = int_to_ptr.hbm [resolvable:$true] %s60
      %s62 = sshll.u32 [#allocation8], 4
      %s63 = int_to_ptr.vmem [resolvable:$true] %s62
      %68 = dma.hbm_to_vmem [thread:$0]  %s61, 1024, %s63, [#allocation9], 128, 128, 8
    $region21: #{tpu_custom_call.1} parent=1 // pred_fallthru
      _
    // Predicated region
    $region22: #{tpu_custom_call.1} parent=1 // pred_check
      _
    $region23: #{tpu_custom_call.1} parent=1 // pred_check_branch
      %70 = sbr.rel (0) target = $region25
    $region24: #{tpu_custom_call.1} parent=1 // pred_region
      %72 = vsyncadd [#allocation9], 0
      %s73 = sshll.u32 %s5, 4
      %s74 = int_to_ptr.hbm [resolvable:$true] %s73
      %s75 = sshll.u32 [#allocation10], 4
      %s76 = int_to_ptr.vmem [resolvable:$true] %s75
      %81 = dma.hbm_to_vmem [thread:$0]  %s74, 1024, %s76, [#allocation9], 128, 128, 8
    $region25: #{tpu_custom_call.1} parent=1 // pred_fallthru
      _
    // Predicated region
    $region26: #{tpu_custom_call.1} parent=1 // pred_check
      _
    $region27: #{tpu_custom_call.1} parent=1 // pred_check_branch
      %83 = sbr.rel (0) target = $region29
    $region28: #{tpu_custom_call.1} parent=1 // pred_region
      _
    $region29: #{tpu_custom_call.1} parent=1 // pred_fallthru
      _
    // Predicated region
    $region30: #{tpu_custom_call.1} parent=1 // pred_check
      _
    $region31: #{tpu_custom_call.1} parent=1 // pred_check_branch
      %85 = sbr.rel (0) target = $region33
    $region32: #{tpu_custom_call.1} parent=1 // pred_region
      %87 = dma.done [#allocation3], 128
    $region33: #{tpu_custom_call.1} parent=1 // pred_fallthru
      _
    // Predicated region
    $region34: #{tpu_custom_call.1} parent=1 // pred_check
      _
    $region35: #{tpu_custom_call.1} parent=1 // pred_check_branch
      %89 = sbr.rel (0) target = $region37
    $region36: #{tpu_custom_call.1} parent=1 // pred_region
      %91 = dma.done [#allocation6], 128
    $region37: #{tpu_custom_call.1} parent=1 // pred_fallthru
      _
    // Predicated region
    $region38: #{tpu_custom_call.1} parent=1 // pred_check
      _
    $region39: #{tpu_custom_call.1} parent=1 // pred_check_branch
      %93 = sbr.rel (0) target = $region41
    $region40: #{tpu_custom_call.1} parent=1 // pred_region
      %95 = dma.done [#allocation6], 512
    $region41: #{tpu_custom_call.1} parent=1 // pred_fallthru
      _
    // Predicated region
    $region42: #{tpu_custom_call.1} parent=1 // pred_check
      _
    $region43: #{tpu_custom_call.1} parent=1 // pred_check_branch
      %97 = sbr.rel (0) target = $region45
    $region44: #{tpu_custom_call.1} parent=1 // pred_region
      %99 = dma.done [#allocation9], 1024
    $region45: #{tpu_custom_call.1} parent=1 // pred_fallthru
      _
    // Predicated region
    $region46: #{tpu_custom_call.1} parent=1 // pred_check
      _
    $region47: #{tpu_custom_call.1} parent=1 // pred_check_branch
      %101 = sbr.rel (0) target = $region49
    $region48: #{tpu_custom_call.1} parent=1 // pred_region
      %103 = dma.done [#allocation9], 1024
    $region49: #{tpu_custom_call.1} parent=1 // pred_fallthru
      _
    %v104 = vld [vmem:[#allocation2] sm:$0xff]
    %v105 = vld [vmem:[%s3] sm:$0x3]
    %v106 = vld [vmem:[#allocation7] sm:$0xff]
    %v107 = vld [vmem:[#allocation7 + $0x8] sm:$0xff]
    %v108 = vld [vmem:[#allocation7 + $0x10] sm:$0xff]
    %v109 = vld [vmem:[#allocation7 + $0x18] sm:$0xff]
    %v110 = vperm.slane %v105, 0
    %vm111 = vcmask 261120
    %v113 = vsel %vm111, %v104, 0
    %115 = vmatpush.msra.mxu0 0.0
    %116 = vmatpush.msra.mxu0 0.0
    %117 = vmatpush.msra.mxu0 0.0
    %118 = vmatpush.msra.mxu0 0.0
    %119 = vmatpush.msra.mxu0 0.0
    %120 = vmatpush.msra.mxu0 0.0
    %121 = vmatpush.msra.mxu0 0.0
    %122 = vmatpush.msra.mxu0 0.0
    %123 = vmatpush.msra.mxu0 0.0
    %124 = vmatpush.msra.mxu0 0.0
    %125 = vmatpush.msra.mxu0 0.0
    %126 = vmatpush.msra.mxu0 0.0
    %127 = vmatpush.msra.mxu0 %v109
    %128 = vmatpush.msra.mxu0 %v108
    %129 = vmatpush.msra.mxu0 %v107
    %130 = vmatpush.msra.mxu0 %v106
    %131 = vmatmul.f32.gmra.mxu0 %v113
    %v132 = vpop.f32.mrf.mxu0
    %v133 = vadd.f32 %v110, %v132
    %134 = vdwg.mxu0
    %v135 = vmax.f32 %v133, 0.0
    %v136 = vld [vmem:[#allocation8] sm:$0xff]
    %v137 = vld [vmem:[#allocation8 + $0x8] sm:$0xff]
    %v138 = vld [vmem:[#allocation8 + $0x10] sm:$0xff]
    %v139 = vld [vmem:[#allocation8 + $0x18] sm:$0xff]
    %v140 = vld [vmem:[#allocation8 + $0x20] sm:$0xff]
    %v141 = vld [vmem:[#allocation8 + $0x28] sm:$0xff]
    %v142 = vld [vmem:[#allocation8 + $0x30] sm:$0xff]
    %v143 = vld [vmem:[#allocation8 + $0x38] sm:$0xff]
    %v144 = vperm.slane %v105, 1
    %vm145 = vcmask 523264
    %v147 = vsel %vm145, %v135, 0
    %149 = vmatpush.msra.mxu0 0.0
    %150 = vmatpush.msra.mxu0 0.0
    %151 = vmatpush.msra.mxu0 0.0
    %152 = vmatpush.msra.mxu0 0.0
    %153 = vmatpush.msra.mxu0 0.0
    %154 = vmatpush.msra.mxu0 0.0
    %155 = vmatpush.msra.mxu0 0.0
    %156 = vmatpush.msra.mxu0 0.0
    %157 = vmatpush.msra.mxu0 %v143
    %158 = vmatpush.msra.mxu0 %v142
    %159 = vmatpush.msra.mxu0 %v141
    %160 = vmatpush.msra.mxu0 %v140
    %161 = vmatpush.msra.mxu0 %v139
    %162 = vmatpush.msra.mxu0 %v138
    %163 = vmatpush.msra.mxu0 %v137
    %164 = vmatpush.msra.mxu0 %v136
    %165 = vmatmul.f32.gmra.mxu0 %v147
    %v166 = vpop.f32.mrf.mxu0
    %v167 = vadd.f32 %v144, %v166
    %168 = vdwg.mxu0
    %v169 = vmax.f32 %v167, 0.0
    %v170 = vld [vmem:[#allocation10] sm:$0xff]
    %v171 = vld [vmem:[#allocation10 + $0x8] sm:$0xff]
    %v172 = vld [vmem:[#allocation10 + $0x10] sm:$0xff]
    %v173 = vld [vmem:[#allocation10 + $0x18] sm:$0xff]
    %v174 = vld [vmem:[#allocation10 + $0x20] sm:$0xff]
    %v175 = vld [vmem:[#allocation10 + $0x28] sm:$0xff]
    %v176 = vld [vmem:[#allocation10 + $0x30] sm:$0xff]
    %v177 = vld [vmem:[#allocation10 + $0x38] sm:$0xff]
    %v178 = vld [vmem:[%s6] sm:$0x1]
    %v180 = vperm.slane %v178, 0
    %v183 = vsel %vm145, %v169, 0
    %185 = vmatpush.msra.mxu0 0.0
    %186 = vmatpush.msra.mxu0 0.0
    %187 = vmatpush.msra.mxu0 0.0
    %188 = vmatpush.msra.mxu0 0.0
    %189 = vmatpush.msra.mxu0 0.0
    %190 = vmatpush.msra.mxu0 0.0
    %191 = vmatpush.msra.mxu0 0.0
    %192 = vmatpush.msra.mxu0 0.0
    %193 = vmatpush.msra.mxu0 %v177
    %194 = vmatpush.msra.mxu0 %v176
    %195 = vmatpush.msra.mxu0 %v175
    %196 = vmatpush.msra.mxu0 %v174
    %197 = vmatpush.msra.mxu0 %v173
    %198 = vmatpush.msra.mxu0 %v172
    %199 = vmatpush.msra.mxu0 %v171
    %200 = vmatpush.msra.mxu0 %v170
    %201 = vmatmul.f32.gmra.mxu0 %v183
    %v202 = vpop.f32.mrf.mxu0
    %v203 = vadd.f32 %v180, %v202
    %204 = vdwg.mxu0
    %v205 = vlaneseq
    %v206 = vand.u32 %v205, 127
    %vm207 = vcmp.eq.s32.totalorder %v206, 16
    %v208 = vsel %vm207, %v203, 0.0
    %209 = vadd.xlane.f32.xlu0 %v208
    %v210 = vpop.xlane.xlu0 %209
    %v211 = vld [vmem:[#allocation5] sm:$0xff]
    %vm212 = vcmp.gt.f32.partialorder %v211, 0.0
    %v213 = vsel %vm212, %v203, -1e+09
    %214 = vmax.xlane.f32.xlu0 %v213
    %v215 = vpop.xlane.xlu0 %214
    %v216 = vsub.f32 %v213, %v215
    %v217 = vmul.f32 %v216, 1.442695
    %v218 = vpow.pop %v217
    %219 = vadd.xlane.f32.xlu0 %v218
    %v220 = vpop.xlane.xlu0 %219
    %v221 = vlog2.pop %v220
    %v222 = vmul.f32 %v221, 0.6931472
    %v223 = vrcp.pop %v220
    %v224 = vsub.f32 %v216, %v222
    %225 = vst [vmem:[#allocation11] sm:$0xff] %v224
    %vm226 = vcmp.ge.f32.partialorder %v213, %v215
    %v227 = vsel %vm226, %v206, 1073741824
    %v228 = vand.u32 %v227, 65535
    %v229 = vshra.s32 %v227, 16
    %v230 = vcvt.s32.f32 %v228
    %v231 = vcvt.s32.f32 %v229
    %232 = vmin.xlane.f32.xlu0 %v231
    %v233 = vpop.xlane.xlu0 %232
    %vm234 = vcmp.eq.f32.partialorder %v231, %v233
    %v235 = vsel %vm234, %v230, inf
    %236 = vmin.xlane.f32.xlu0 %v235
    %v237 = vpop.xlane.xlu0 %236
    %v238 = vcvt.f32.s32 %v237
    %v239 = vcvt.f32.s32 %v233
    %v240 = vshll.u32 %v239, 16
    %v241 = vadd.s32 %v240, %v238
    %v242 = vsub.f32 0.0, %v222
    %v243 = vmul.f32 %v218, %v216
    %244 = vadd.xlane.f32.xlu0 %v243
    %v245 = vpop.xlane.xlu0 %244
    %v246 = vmul.f32 %v245, %v223
    %v247 = vsub.f32 %v222, %v246
    %vm248 = vcmp.eq.s32.totalorder %v206, 0
    %v249 = vsel %vm248, %v210, 0.0
    %vm250 = vcmp.eq.s32.totalorder %v206, 1
    %v251 = vsel %vm250, %v242, %v249
    %vm252 = vcmp.eq.s32.totalorder %v206, 2
    %v253 = vcvt.s32.f32 %v241
    %v254 = vsel %vm252, %v253, %v251
    %vm255 = vcmp.eq.s32.totalorder %v206, 3
    %v256 = vsel %vm255, %v247, %v254
    %257 = vst [vmem:[#allocation12] sm:$0xff] %v256
    // Predicated region
    $region50: #{tpu_custom_call.1} parent=1 // pred_check
      _
    $region51: #{tpu_custom_call.1} parent=1 // pred_check_branch
      %259 = sbr.rel (0) target = $region53
    $region52: #{tpu_custom_call.1} parent=1 // pred_region
      %261 = vsyncadd [#allocation4], 0
      %s263 = sshll.u32 [#allocation11], 4
      %s264 = int_to_ptr.vmem [resolvable:$true] %s263
      %s265 = sshll.u32 %s7, 4
      %s266 = int_to_ptr.hbm [resolvable:$true] %s265
      %268 = dma.vmem_to_hbm [thread:$0]  %s264, 128, %s266, [#allocation4]
    $region53: #{tpu_custom_call.1} parent=1 // pred_fallthru
      _
    // Predicated region
    $region54: #{tpu_custom_call.1} parent=1 // pred_check
      _
    $region55: #{tpu_custom_call.1} parent=1 // pred_check_branch
      %270 = sbr.rel (0) target = $region57
    $region56: #{tpu_custom_call.1} parent=1 // pred_region
      %272 = vsyncadd [#allocation13], 0
      %s274 = sshll.u32 [#allocation12], 4
      %s275 = int_to_ptr.vmem [resolvable:$true] %s274
      %s276 = sshll.u32 %s8, 4
      %s277 = int_to_ptr.hbm [resolvable:$true] %s276
      %279 = dma.vmem_to_hbm [thread:$0]  %s275, 128, %s277, [#allocation13]
    $region57: #{tpu_custom_call.1} parent=1 // pred_fallthru
      _
    // Predicated region
    $region58: #{tpu_custom_call.1} parent=1 // pred_check
      _
    $region59: #{tpu_custom_call.1} parent=1 // pred_check_branch
      %281 = sbr.rel (0) target = $region61
    $region60: #{tpu_custom_call.1} parent=1 // pred_region
      %283 = dma.done [#allocation4], 128
    $region61: #{tpu_custom_call.1} parent=1 // pred_fallthru
      _
    // Predicated region
    $region62: #{tpu_custom_call.1} parent=1 // pred_check
      _
    $region63: #{tpu_custom_call.1} parent=1 // pred_check_branch
      %285 = sbr.rel (0) target = $region65
    $region64: #{tpu_custom_call.1} parent=1 // pred_region
      %287 = dma.done [#allocation13], 128
    $region65: #{tpu_custom_call.1} parent=1 // pred_fallthru
      _
    %288 = vsyncpa [#allocation3], 1
    %289 = vsyncpa [#allocation6], 1
    %290 = vsyncpa [#allocation9], 1
    %291 = vsyncpa [#allocation4], 1
    %292 = vsyncpa [#allocation13], 1

</llo_original>
